<compile_context>
chip_gen: v7x
topology: tpu7x:2x2x1
jax: 0.10.0
libtpu: 0.0.40
codegen_flags: <defaults>
</compile_context>

<pallas_src>
import jax
import jax.numpy as jnp
from jax.experimental import pallas as pl
from jax.experimental.pallas import tpu as pltpu


def _round_up(x, m):
    return ((x + m - 1) // m) * m


def _pick_n_tile(np_dim):
    # Prefer a single full-width tile (no backbone recompute across N tiles)
    # as long as the bf16 head-weight block stays small; otherwise fall back
    # to lane-dense sub-tiles that megacore can shard.
    if np_dim <= 1024:
        return np_dim
    for c in (512, 256, 128):
        if np_dim % c == 0:
            return c
    return np_dim


# ---------------------------------------------------------------------------
# Fused kernel:  features = x @ Wb + bb   (accumulated over K tiles in VMEM)
#                logits   = features @ Wh + bh   (written once, at last K tile)
# ---------------------------------------------------------------------------
def _sinet_fused_kernel(x_ref, bw_ref, bb_ref, hw_ref, hb_ref, o_ref, feat_acc):
    k = pl.program_id(1)

    @pl.when(k == 0)
    def _init():
        feat_acc[...] = jnp.zeros_like(feat_acc)

    # backbone partial matmul on this K tile (bf16 x bf16 -> f32 accumulate)
    feat_acc[...] += jnp.dot(
        x_ref[...], bw_ref[...], preferred_element_type=jnp.float32
    )

    @pl.when(k == pl.num_programs(1) - 1)
    def _finalize():
        feats = feat_acc[...] + bb_ref[...]  # f32 bias add
        logits = (
            jnp.dot(
                feats.astype(hw_ref.dtype),
                hw_ref[...],
                preferred_element_type=jnp.float32,
            )
            + hb_ref[...]
        )
        o_ref[...] = logits.astype(o_ref.dtype)


def sinet_fused_call(x_pad, bb_w, bb_b, head_w, head_b, *, k_tile, n_tile):
    """One pallas_call: padded x [Bp, Kp] -> padded logits [Bp, Np] (f32)."""
    Bp, K1p = x_pad.shape
    Dp = bb_w.shape[1]
    Np = head_w.shape[1]
    assert K1p % k_tile == 0 and Np % n_tile == 0

    grid = (Np // n_tile, K1p // k_tile)  # (parallel N, reduction K last)

    return pl.pallas_call(
        _sinet_fused_kernel,
        out_shape=jax.ShapeDtypeStruct((Bp, Np), jnp.float32),
        grid=grid,
        in_specs=[
            pl.BlockSpec((Bp, k_tile), lambda n, k: (0, k)),   # x
            pl.BlockSpec((k_tile, Dp), lambda n, k: (k, 0)),   # backbone W
            pl.BlockSpec((1, Dp), lambda n, k: (0, 0)),        # backbone b
            pl.BlockSpec((Dp, n_tile), lambda n, k: (0, n)),   # fused head W
            pl.BlockSpec((1, n_tile), lambda n, k: (0, n)),    # fused head b
        ],
        out_specs=pl.BlockSpec((Bp, n_tile), lambda n, k: (0, n)),
        scratch_shapes=[pltpu.VMEM((Bp, Dp), jnp.float32)],
        compiler_params=pltpu.CompilerParams(
            dimension_semantics=("parallel", "arbitrary")
        ),
    )(x_pad, bb_w, bb_b, head_w, head_b)


# ---------------------------------------------------------------------------
# Deterministic parameter construction (mirrors SiNet.__init__ shapes).
# Weights are pre-padded / pre-concatenated once here (no per-call concat).
# ---------------------------------------------------------------------------
def make_params(key, in_feats, embd_dim, init_cls_num, inc_cls_num, task_num,
                k_tile=512):
    keys = jax.random.split(key, 2 + 2 * task_num)

    # clamp K tile to the (128-rounded) input width, then pad K to a multiple
    k_tile = min(k_tile, _round_up(in_feats, 128))
    K1p = _round_up(in_feats, k_tile)
    Dp = _round_up(embd_dim, 128)
    total_cls = init_cls_num + (task_num - 1) * inc_cls_num
    Np = _round_up(total_cls, 128)
    n_tile = _pick_n_tile(Np)

    # stand-in backbone: Linear(in_feats -> embd_dim)
    bb_w = jax.random.normal(keys[0], (in_feats, embd_dim), jnp.float32) * 0.02
    bb_b = jax.random.normal(keys[1], (1, embd_dim), jnp.float32) * 0.02

    bb_w_p = (
        jnp.zeros((K1p, Dp), jnp.bfloat16)
        .at[:in_feats, :embd_dim]
        .set(bb_w.astype(jnp.bfloat16))
    )
    bb_b_p = jnp.zeros((1, Dp), jnp.float32).at[:, :embd_dim].set(bb_b)

    # classifier_pool: [Linear(embd_dim, init_cls_num)]
    #                + [Linear(embd_dim, inc_cls_num)] * (task_num - 1)
    # pre-concatenated along the output axis into one zero-padded slab.
    head_w_p = jnp.zeros((Dp, Np), jnp.bfloat16)
    head_b_p = jnp.zeros((1, Np), jnp.float32)
    offsets = []
    col = 0
    for t in range(task_num):
        n_out = init_cls_num if t == 0 else inc_cls_num
        cw = jax.random.normal(keys[2 + 2 * t], (embd_dim, n_out), jnp.float32) * 0.02
        cb = jax.random.normal(keys[3 + 2 * t], (1, n_out), jnp.float32) * 0.02
        head_w_p = head_w_p.at[:embd_dim, col:col + n_out].set(cw.astype(jnp.bfloat16))
        head_b_p = head_b_p.at[:, col:col + n_out].set(cb)
        offsets.append((col, n_out))
        col += n_out

    return {
        "bb_w": bb_w_p,
        "bb_b": bb_b_p,
        "head_w": head_w_p,
        "head_b": head_b_p,
        "head_offsets": offsets,   # per-task (column_start, n_out)
        "k_tile": k_tile,
        "n_tile": n_tile,
        "in_feats": in_feats,
    }


# ---------------------------------------------------------------------------
# SiNet forward (mirrors SiNet.forward(x, expert_id, inference))
# ---------------------------------------------------------------------------
def sinet_forward(params, x, expert_id, cur_task_id, inference=False):
    del expert_id  # TODO(synk): consumed by the real ViT backbone (expert routing)

    B = x.shape[0]
    x_flat = x.reshape(B, -1)                      # torch .view(B, -1) layout
    K1p = params["bb_w"].shape[0]
    Bp = _round_up(max(B, 8), 8)                   # sublane-dense batch

    x_pad = (
        jnp.zeros((Bp, K1p), jnp.bfloat16)
        .at[:B, : x_flat.shape[1]]
        .set(x_flat.astype(jnp.bfloat16))
    )

    logits_full = sinet_fused_call(
        x_pad,
        params["bb_w"], params["bb_b"],
        params["head_w"], params["head_b"],
        k_tile=params["k_tile"], n_tile=params["n_tile"],
    )  # [Bp, Np] f32, all heads computed lane-dense

    offsets = params["head_offsets"]
    if inference:
        # cat([head_i(features) for i in 0..cur_task_id], dim=1)
        start = 0
        end = offsets[cur_task_id][0] + offsets[cur_task_id][1]
    else:
        # cat([classifier_pool[cur_task_id](features)], dim=1)
        start, n_out = offsets[cur_task_id]
        end = start + n_out
    return logits_full[:B, start:end]


# ---------------------------------------------------------------------------
# main
# ---------------------------------------------------------------------------
if __name__ == "__main__":
    # small, module-consistent sizes
    B, C, H, W = 2, 4, 16, 16
    embd_dim = 32
    init_cls_num = 8
    inc_cls_num = 8
    task_num = 3
    in_feats = C * H * W  # 1024 -> two K tiles of 512 (exercises the reduction grid)

    key = jax.random.PRNGKey(0)
    k_x, k_p = jax.random.split(key)

    x = jax.random.normal(k_x, (B, C, H, W), jnp.float32)
    params = make_params(k_p, in_feats, embd_dim, init_cls_num, inc_cls_num, task_num)

    cur_task_id = 1  # after two calls to update_fc()

    # training-mode forward: single current head
    logits_train = sinet_forward(params, x, expert_id=0,
                                 cur_task_id=cur_task_id, inference=False)
    logits_train = jax.block_until_ready(logits_train)
    assert logits_train.shape == (B, inc_cls_num), logits_train.shape

    # inference-mode forward: concat of heads 0..cur_task_id along dim=1
    logits_inf = sinet_forward(params, x, expert_id=0,
                               cur_task_id=cur_task_id, inference=True)
    logits_inf = jax.block_until_ready(logits_inf)
    assert logits_inf.shape == (B, init_cls_num + cur_task_id * inc_cls_num), logits_inf.shape

    # sanity: fused kernel matches plain-jnp reference with the same dtype chain
    Bp = _round_up(max(B, 8), 8)
    K1p = params["bb_w"].shape[0]
    x_pad = (
        jnp.zeros((Bp, K1p), jnp.bfloat16)
        .at[:B, :in_feats]
        .set(x.reshape(B, -1).astype(jnp.bfloat16))
    )
    feats_ref = jnp.dot(x_pad, params["bb_w"],
                        preferred_element_type=jnp.float32) + params["bb_b"]
    ref_full = jnp.dot(feats_ref.astype(jnp.bfloat16), params["head_w"],
                       preferred_element_type=jnp.float32) + params["head_b"]

    n_valid = init_cls_num + cur_task_id * inc_cls_num
    ref_inf = ref_full[:B, :n_valid]
    assert jnp.allclose(logits_inf, ref_inf, atol=1e-2, rtol=1e-2), "inference mismatch"

    t_start = init_cls_num + (cur_task_id - 1) * inc_cls_num
    ref_train = ref_full[:B, t_start:t_start + inc_cls_num]
    assert jnp.allclose(logits_train, ref_train, atol=1e-2, rtol=1e-2), "train mismatch"

    print("KERNEL_OK")
</pallas_src>

<mosaic_0001>
module attributes {stable_mosaic.version = 11 : i64} {
  func.func @_sinet_fused_kernel(%arg0: i32, %arg1: i32, %arg2: memref<8x512xbf16, #tpu.memory_space<vmem>>, %arg3: memref<512x128xbf16, #tpu.memory_space<vmem>>, %arg4: memref<1x128xf32, #tpu.memory_space<vmem>>, %arg5: memref<128x128xbf16, #tpu.memory_space<vmem>>, %arg6: memref<1x128xf32, #tpu.memory_space<vmem>>, %arg7: memref<8x128xf32, #tpu.memory_space<vmem>>, %arg8: memref<8x128xf32, #tpu.memory_space<vmem>>) attributes {dimension_semantics = [#tpu.dimension_semantics<parallel>, #tpu.dimension_semantics<arbitrary>], iteration_bounds = array<i64: 1, 2>, scalar_prefetch = 0 : i64, scratch_operands = 1 : i64, tpu.core_type = #tpu.core_type<tc>, window_params = [{transform_indices = @transform_0, window_bounds = array<i64: 8, 512>}, {transform_indices = @transform_1, window_bounds = array<i64: 512, 128>}, {pipeline_mode = #tpu.pipeline_mode<synchronous>, transform_indices = @transform_2, window_bounds = array<i64: 1, 128>}, {transform_indices = @transform_3, window_bounds = array<i64: 128, 128>}, {transform_indices = @transform_4, window_bounds = array<i64: 1, 128>}, {transform_indices = @transform_5, window_bounds = array<i64: 8, 128>}]} {
    %c0_i32 = arith.constant 0 : i32
    %0 = arith.cmpi eq, %arg1, %c0_i32 : i32
    %1 = arith.extui %0 : i1 to i32
    %c0_i32_0 = arith.constant 0 : i32
    %2 = arith.cmpi ne, %1, %c0_i32_0 : i32
    scf.if %2 {
      %cst_9 = arith.constant 0.000000e+00 : f32
      %12 = vector.broadcast %cst_9 : f32 to vector<8x128xf32>
      %c0_10 = arith.constant 0 : index
      %c0_11 = arith.constant 0 : index
      %13 = vector.load %arg8[%c0_10, %c0_11] : memref<8x128xf32, #tpu.memory_space<vmem>>, vector<8x128xf32>
      tpu.vector_store %arg8[%c0_10, %c0_11], %12 {strides = array<i32>} : memref<8x128xf32, #tpu.memory_space<vmem>>, vector<8x128xf32>,
    } else {
    }
    %c0 = arith.constant 0 : index
    %c0_1 = arith.constant 0 : index
    %3 = vector.load %arg8[%c0, %c0_1] : memref<8x128xf32, #tpu.memory_space<vmem>>, vector<8x128xf32>
    %c0_2 = arith.constant 0 : index
    %c0_3 = arith.constant 0 : index
    %4 = vector.load %arg2[%c0_2, %c0_3] : memref<8x512xbf16, #tpu.memory_space<vmem>>, vector<8x512xbf16>
    %c0_4 = arith.constant 0 : index
    %c0_5 = arith.constant 0 : index
    %5 = vector.load %arg3[%c0_4, %c0_5] : memref<512x128xbf16, #tpu.memory_space<vmem>>, vector<512x128xbf16>
    %cst = arith.constant dense<0.000000e+00> : vector<8x128xf32>
    %6 = tpu.matmul %4, %5, %cst {dimension_numbers = #tpu.dot_dimension_numbers<[1], [0], [0], [1], [0, 0, 1, 1], [], []>} : vector<8x512xbf16>, vector<512x128xbf16>, vector<8x128xf32> -> vector<8x128xf32>
    %7 = arith.addf %3, %6 : vector<8x128xf32>
    %c0_6 = arith.constant 0 : index
    %c0_7 = arith.constant 0 : index
    %8 = vector.load %arg8[%c0_6, %c0_7] : memref<8x128xf32, #tpu.memory_space<vmem>>, vector<8x128xf32>
    tpu.vector_store %arg8[%c0_6, %c0_7], %7 {strides = array<i32>} : memref<8x128xf32, #tpu.memory_space<vmem>>, vector<8x128xf32>,
    %c1_i32 = arith.constant 1 : i32
    %9 = arith.cmpi eq, %arg1, %c1_i32 : i32
    %10 = arith.extui %9 : i1 to i32
    %c0_i32_8 = arith.constant 0 : i32
    %11 = arith.cmpi ne, %10, %c0_i32_8 : i32
    scf.if %11 {
      %c0_9 = arith.constant 0 : index
      %c0_10 = arith.constant 0 : index
      %12 = vector.load %arg8[%c0_9, %c0_10] : memref<8x128xf32, #tpu.memory_space<vmem>>, vector<8x128xf32>
      %c0_11 = arith.constant 0 : index
      %c0_12 = arith.constant 0 : index
      %13 = vector.load %arg4[%c0_11, %c0_12] : memref<1x128xf32, #tpu.memory_space<vmem>>, vector<1x128xf32>
      %14 = vector.broadcast %13 : vector<1x128xf32> to vector<8x128xf32>
      %15 = arith.addf %12, %14 : vector<8x128xf32>
      %16 = arith.truncf %15 : vector<8x128xf32> to vector<8x128xbf16>
      %c0_13 = arith.constant 0 : index
      %c0_14 = arith.constant 0 : index
      %17 = vector.load %arg5[%c0_13, %c0_14] : memref<128x128xbf16, #tpu.memory_space<vmem>>, vector<128x128xbf16>
      %cst_15 = arith.constant dense<0.000000e+00> : vector<8x128xf32>
      %18 = tpu.matmul %16, %17, %cst_15 {dimension_numbers = #tpu.dot_dimension_numbers<[1], [0], [0], [1], [0, 0, 1, 1], [], []>} : vector<8x128xbf16>, vector<128x128xbf16>, vector<8x128xf32> -> vector<8x128xf32>
      %c0_16 = arith.constant 0 : index
      %c0_17 = arith.constant 0 : index
      %19 = vector.load %arg6[%c0_16, %c0_17] : memref<1x128xf32, #tpu.memory_space<vmem>>, vector<1x128xf32>
      %20 = vector.broadcast %19 : vector<1x128xf32> to vector<8x128xf32>
      %21 = arith.addf %18, %20 : vector<8x128xf32>
      %c0_18 = arith.constant 0 : index
      %c0_19 = arith.constant 0 : index
      %22 = vector.load %arg7[%c0_18, %c0_19] : memref<8x128xf32, #tpu.memory_space<vmem>>, vector<8x128xf32>
      tpu.vector_store %arg7[%c0_18, %c0_19], %21 {strides = array<i32>} : memref<8x128xf32, #tpu.memory_space<vmem>>, vector<8x128xf32>,
    } else {
    }
    return
  }
  func.func @transform_0(%arg0: i32, %arg1: i32) -> (i32, i32) {
    %c0_i32 = arith.constant 0 : i32
    %c0_i32_0 = arith.constant 0 : i32
    return %c0_i32, %arg1 : i32, i32
  }
  func.func @transform_1(%arg0: i32, %arg1: i32) -> (i32, i32) {
    %c0_i32 = arith.constant 0 : i32
    %c0_i32_0 = arith.constant 0 : i32
    return %arg1, %c0_i32 : i32, i32
  }
  func.func @transform_2(%arg0: i32, %arg1: i32) -> (i32, i32) {
    %c0_i32 = arith.constant 0 : i32
    %c0_i32_0 = arith.constant 0 : i32
    %c0_i32_1 = arith.constant 0 : i32
    return %c0_i32, %c0_i32_0 : i32, i32
  }
  func.func @transform_3(%arg0: i32, %arg1: i32) -> (i32, i32) {
    %c0_i32 = arith.constant 0 : i32
    %c0_i32_0 = arith.constant 0 : i32
    return %c0_i32, %arg0 : i32, i32
  }
  func.func @transform_4(%arg0: i32, %arg1: i32) -> (i32, i32) {
    %c0_i32 = arith.constant 0 : i32
    %c0_i32_0 = arith.constant 0 : i32
    return %c0_i32, %arg0 : i32, i32
  }
  func.func @transform_5(%arg0: i32, %arg1: i32) -> (i32, i32) {
    %c0_i32 = arith.constant 0 : i32
    %c0_i32_0 = arith.constant 0 : i32
    return %c0_i32, %arg0 : i32, i32
  }
}

</mosaic_0001>

<llo_original>
// kernel: tpu_custom_call.1
$region0: #{tpu_custom_call.1}
  #allocation0 [shape = 'u32[]', space=smem, size = 0x4, offset = 0x4, fixed_abs, tag = 'smem constant byte address 0x4 - core index']
  #allocation1 [shape = 'u32[144,128]{1,0:T(1,128)}', space=vmem, size = 0x12000, scoped, tag = 'internal scratch']
  #allocation2 [shape = 'f32[8,128]{1,0:T(8,128)}', space=vmem, size = 0x1000, scoped, tag = 'scratch operand']
  %s0 = inlined_call_operand.hbm [shape: bf16[8,1024], index: 0, kind: input, shape index: {}]
  %s1 = inlined_call_operand.hbm [shape: bf16[1024,128], index: 1, kind: input, shape index: {}]
  %s2 = inlined_call_operand.vmem [shape: f32[1,128], index: 2, kind: input, shape index: {}]
  %s3 = inlined_call_operand.hbm [shape: bf16[128,128], index: 3, kind: input, shape index: {}]
  %s4 = inlined_call_operand.vmem [shape: f32[1,128], index: 4, kind: input, shape index: {}]
  %s5 = inlined_call_operand.hbm [shape: f32[8,128], index: 5, kind: output, shape index: {}]
  %s6 = sld [smem:[#allocation0]]
  $region73: #{tpu_custom_call.1} parent=0
    _
  %s8 = ssub.s32 1, %s6
  %s9 = scalar_select 0, %s8, %s6
  $region1: #{tpu_custom_call.1} parent=0
    #allocation3 [shape = 'u8[16384]{0}', space=vmem, size = 0x4000, scoped, tag = 'input window, operand 0']
    #allocation4 [shape = 's32[2]{0}', space=sflag, size = 0x8, scoped, tag = 'scoped memory for tpu_custom_call.1']
    #allocation5 [shape = 's32[2]{0}', space=sflag, size = 0x8, scoped, tag = 'scoped memory for tpu_custom_call.1']
    #allocation6 [shape = 'u8[262144]{0}', space=vmem, size = 0x40000, scoped, tag = 'input window, operand 1']
    #allocation7 [shape = 's32[2]{0}', space=sflag, size = 0x8, scoped, tag = 'scoped memory for tpu_custom_call.1']
    #allocation8 [shape = 'u8[32768]{0}', space=vmem, size = 0x8000, scoped, tag = 'input window, operand 3, single buffered']
    #allocation9 [shape = 'u8[4096]{0}', space=vmem, size = 0x1000, scoped, tag = 'output window, operand 0, single buffered']
    %10 = vsyncpa [#allocation4], 0
    %s11 = scalar_lea.sflag [#allocation4], 1
    %12 = vsyncpa %s11, 0
    %13 = vsyncpa [#allocation7], 0
    %s14 = scalar_lea.sflag [#allocation7], 1
    %15 = vsyncpa %s14, 0
    %16 = vsyncpa [#allocation5], 0
    loop: start=0, step=1, limit=4
    $region2: #{tpu_custom_call.1} parent=1 // loop_pre_header
      _
    $region3: #{tpu_custom_call.1} parent=1 // loop_header
      %s18 = sphi 0, %s22
      %p19 = scmp.ge.s32.totalorder %s18, 4
      %s25 = sphi 0, %s37
      %s26 = sphi 0, %s33
      %s27 = sphi 0, %s25
      %s28 = sphi 0, %s26
      %s29 = sphi 0, %s27
      %s30 = sphi 0, %s28
      %s40 = sphi 0, %s42
      %s43 = sphi 0, %s40
      %s44 = sphi 0, %s43
      %s60 = sphi 0, %s44
      %s66 = sphi 0, %s68
      %s69 = sphi 0, %s66
      %s70 = sphi 0, %s69
      %s86 = sphi 0, %s70
      %s90 = sphi 0, %s90
      %s92 = sphi 0, %s90
      %s93 = sphi 0, %s92
      %s107 = sphi 0, %s93
      %s113 = sphi 0, %s115
      %s116 = sphi 0, %s113
      %s117 = sphi 0, %s116
      %s133 = sphi 0, %s117
      %s139 = sphi 0, %s141
      %s142 = sphi 0, %s139
      %s143 = sphi 0, %s142
      %s159 = sphi 0, %s143
      %s165 = sphi 0, %s167
      %s168 = sphi 0, %s165
      %s169 = sphi 0, %s168
      %s185 = sphi 0, %s169
    $region4: #{tpu_custom_call.1} parent=1 // loop_header_branch
      %21 = sbr.rel (%p19) target = $region8
    $region5: #{tpu_custom_call.1} parent=1 // loop_body
      %s23 = ssub.s32 %s18, 1
      %s24 = ssub.s32 %s18, 2
      %s31 = sadd.s32 1, %s26
      %p32 = scmp.ge.s32.totalorder %s31, 2
      %s33 = scalar_select %p32, 0, %s31
      %s34 = sadd.s32 1, %s25
      %s35 = scalar_select %p32, %s34, %s25
      %p36 = scmp.ge.s32.totalorder %s35, 1
      %s37 = scalar_select %p36, 0, %s35
      %s38 = ssub.s32 %s26, %s33
      %p39 = scmp.eq.s32.totalorder %s38, 0
      %s41 = sadd.s32 %s40, 1
      %s42 = scalar_select %p39, %s40, %s41
      %p45 = pneg %p39
      %p46 = scmp.eq.s32.totalorder %s18, 1
      %p47 = por %p45, %p46
      %p48 = scmp.ne.s32.totalorder %s40, %s43
      %p49 = scmp.eq.s32.totalorder %s18, 0
      %p50 = por %p48, %p49
      %p51 = scmp.ne.s32.totalorder %s40, %s43
      %p52 = scmp.eq.s32.totalorder %s23, 1
      %p53 = por %p51, %p52
      %p54 = scmp.ne.s32.totalorder %s43, %s44
      %p55 = scmp.eq.s32.totalorder %s23, 0
      %p56 = por %p54, %p55
      %p57 = scmp.ne.s32.totalorder %s43, %s44
      %p58 = scmp.eq.s32.totalorder %s24, 1
      %p59 = por %p57, %p58
      %p61 = scmp.ne.s32.totalorder %s44, %s60
      %p62 = scmp.eq.s32.totalorder %s24, 0
      %p63 = por %p61, %p62
      %s64 = ssub.s32 %s26, %s33
      %p65 = scmp.eq.s32.totalorder %s64, 0
      %s67 = sadd.s32 %s66, 1
      %s68 = scalar_select %p65, %s66, %s67
      %p71 = pneg %p65
      %p72 = scmp.eq.s32.totalorder %s18, 1
      %p73 = por %p71, %p72
      %p74 = scmp.ne.s32.totalorder %s66, %s69
      %p75 = scmp.eq.s32.totalorder %s18, 0
      %p76 = por %p74, %p75
      %p77 = scmp.ne.s32.totalorder %s66, %s69
      %p78 = scmp.eq.s32.totalorder %s23, 1
      %p79 = por %p77, %p78
      %p80 = scmp.ne.s32.totalorder %s69, %s70
      %p81 = scmp.eq.s32.totalorder %s23, 0
      %p82 = por %p80, %p81
      %p83 = scmp.ne.s32.totalorder %s69, %s70
      %p84 = scmp.eq.s32.totalorder %s24, 1
      %p85 = por %p83, %p84
      %p87 = scmp.ne.s32.totalorder %s70, %s86
      %p88 = scmp.eq.s32.totalorder %s24, 0
      %p89 = por %p87, %p88
      %s91 = sadd.s32 %s90, 1
      %p94 = scmp.eq.s32.totalorder %s18, 1
      %p95 = scmp.ne.s32.totalorder %s90, %s92
      %p96 = scmp.eq.s32.totalorder %s18, 0
      %p97 = por %p95, %p96
      %p98 = scmp.ne.s32.totalorder %s90, %s92
      %p99 = scmp.eq.s32.totalorder %s23, 1
      %p100 = por %p98, %p99
      %p101 = scmp.ne.s32.totalorder %s92, %s93
      %p102 = scmp.eq.s32.totalorder %s23, 0
      %p103 = por %p101, %p102
      %p104 = scmp.ne.s32.totalorder %s92, %s93
      %p105 = scmp.eq.s32.totalorder %s24, 1
      %p106 = por %p104, %p105
      %p108 = scmp.ne.s32.totalorder %s93, %s107
      %p109 = scmp.eq.s32.totalorder %s24, 0
      %p110 = por %p108, %p109
      %s111 = ssub.s32 %s25, %s37
      %p112 = scmp.eq.s32.totalorder %s111, 0
      %s114 = sadd.s32 %s113, 1
      %s115 = scalar_select %p112, %s113, %s114
      %p118 = pneg %p112
      %p119 = scmp.eq.s32.totalorder %s18, 1
      %p120 = por %p118, %p119
      %p121 = scmp.ne.s32.totalorder %s113, %s116
      %p122 = scmp.eq.s32.totalorder %s18, 0
      %p123 = por %p121, %p122
      %p124 = scmp.ne.s32.totalorder %s113, %s116
      %p125 = scmp.eq.s32.totalorder %s23, 1
      %p126 = por %p124, %p125
      %p127 = scmp.ne.s32.totalorder %s116, %s117
      %p128 = scmp.eq.s32.totalorder %s23, 0
      %p129 = por %p127, %p128
      %p130 = scmp.ne.s32.totalorder %s116, %s117
      %p131 = scmp.eq.s32.totalorder %s24, 1
      %p132 = por %p130, %p131
      %p134 = scmp.ne.s32.totalorder %s117, %s133
      %p135 = scmp.eq.s32.totalorder %s24, 0
      %p136 = por %p134, %p135
      %s137 = ssub.s32 %s25, %s37
      %p138 = scmp.eq.s32.totalorder %s137, 0
      %s140 = sadd.s32 %s139, 1
      %s141 = scalar_select %p138, %s139, %s140
      %p144 = pneg %p138
      %p145 = scmp.eq.s32.totalorder %s18, 1
      %p146 = por %p144, %p145
      %p147 = scmp.ne.s32.totalorder %s139, %s142
      %p148 = scmp.eq.s32.totalorder %s18, 0
      %p149 = por %p147, %p148
      %p150 = scmp.ne.s32.totalorder %s139, %s142
      %p151 = scmp.eq.s32.totalorder %s23, 1
      %p152 = por %p150, %p151
      %p153 = scmp.ne.s32.totalorder %s142, %s143
      %p154 = scmp.eq.s32.totalorder %s23, 0
      %p155 = por %p153, %p154
      %p156 = scmp.ne.s32.totalorder %s142, %s143
      %p157 = scmp.eq.s32.totalorder %s24, 1
      %p158 = por %p156, %p157
      %p160 = scmp.ne.s32.totalorder %s143, %s159
      %p161 = scmp.eq.s32.totalorder %s24, 0
      %p162 = por %p160, %p161
      %s163 = ssub.s32 %s25, %s37
      %p164 = scmp.eq.s32.totalorder %s163, 0
      %s166 = sadd.s32 %s165, 1
      %s167 = scalar_select %p164, %s165, %s166
      %p170 = pneg %p164
      %p171 = scmp.eq.s32.totalorder %s18, 1
      %p172 = por %p170, %p171
      %p173 = scmp.ne.s32.totalorder %s165, %s168
      %p174 = scmp.eq.s32.totalorder %s18, 0
      %p175 = por %p173, %p174
      %p176 = scmp.ne.s32.totalorder %s165, %s168
      %p177 = scmp.eq.s32.totalorder %s23, 1
      %p178 = por %p176, %p177
      %p179 = scmp.ne.s32.totalorder %s168, %s169
      %p180 = scmp.eq.s32.totalorder %s23, 0
      %p181 = por %p179, %p180
      %p182 = scmp.ne.s32.totalorder %s168, %s169
      %p183 = scmp.eq.s32.totalorder %s24, 1
      %p184 = por %p182, %p183
      %p186 = scmp.ne.s32.totalorder %s169, %s185
      %p187 = scmp.eq.s32.totalorder %s24, 0
      %p188 = por %p186, %p187
      %p189 = scmp.le.s32.totalorder 1, %s18
      %p190 = scmp.lt.s32.totalorder %s18, 3
      %p191 = pnand %p189, %p190
      %p192 = pneg %p191
      // Predicated region
      $region9: #{tpu_custom_call.1} parent=5 // pred_check
        _
      $region10: #{tpu_custom_call.1} parent=5 // pred_check_branch
        %194 = sbr.rel (%p191) target = $region12
      $region11: #{tpu_custom_call.1} parent=5 // pred_region
        %s195 = ssub.s32 %s18, 1
        // Predicated region
        $region13: #{tpu_custom_call.1} parent=11 // pred_check
          %p196 = pneg %p103
        $region14: #{tpu_custom_call.1} parent=11 // pred_check_branch
          %198 = sbr.rel (%p196) target = $region16
        $region15: #{tpu_custom_call.1} parent=11 // pred_region
          _
        $region16: #{tpu_custom_call.1} parent=11 // pred_fallthru
          _
        // Predicated region
        $region17: #{tpu_custom_call.1} parent=11 // pred_check
          %p199 = pneg %p129
        $region18: #{tpu_custom_call.1} parent=11 // pred_check_branch
          %201 = sbr.rel (%p199) target = $region20
        $region19: #{tpu_custom_call.1} parent=11 // pred_region
          %s203 = ssub.s32 1024, 1024
          %204 = vsyncadd [#allocation7], %s203
          %s205 = smul.addr %s27, 64
          %s206 = scalar_lea.hbm %s3, %s205
          %s207 = sshll.u32 [#allocation8], 4
          %s208 = int_to_ptr.vmem [resolvable:$true] %s207
          %213 = dma.hbm_to_vmem [thread:$0]  %s206, 1024, %s208, [#allocation7], 64, 64, 4
        $region20: #{tpu_custom_call.1} parent=11 // pred_fallthru
          _
        // Predicated region
        $region21: #{tpu_custom_call.1} parent=11 // pred_check
          %p214 = pneg %p155
        $region22: #{tpu_custom_call.1} parent=11 // pred_check_branch
          %216 = sbr.rel (%p214) target = $region24
        $region23: #{tpu_custom_call.1} parent=11 // pred_region
          %p217 = scmp.lt.s32.totalorder %s27, 0
          %s218 = scalar_select %p217, %s27, 0
          %s219 = scalar_lea.vmem %s4, %s218
        $region24: #{tpu_custom_call.1} parent=11 // pred_fallthru
          _
      $region12: #{tpu_custom_call.1} parent=5 // pred_fallthru
        _
      %p220 = scmp.lt.s32.totalorder %s18, 2
      // Predicated region
      $region25: #{tpu_custom_call.1} parent=5 // pred_check
        %p221 = pneg %p220
      $region26: #{tpu_custom_call.1} parent=5 // pred_check_branch
        %223 = sbr.rel (%p221) target = $region28
      $region27: #{tpu_custom_call.1} parent=5 // pred_region
        // Predicated region
        $region29: #{tpu_custom_call.1} parent=27 // pred_check
          %p224 = pneg %p50
        $region30: #{tpu_custom_call.1} parent=27 // pred_check_branch
          %226 = sbr.rel (%p224) target = $region32
        $region31: #{tpu_custom_call.1} parent=27 // pred_region
          %s227 = sand.u32 %s40, 1
          %s228 = scalar_lea.sflag [#allocation4], %s227
          %s229 = sand.u32 %s40, 1
          %s230 = smul.addr %s229, 16
          %s231 = scalar_lea.vmem [#allocation3], %s230
          %s232 = smul.u32 4, %s26
          %s234 = ssub.s32 256, 256
          %235 = vsyncadd %s228, %s234
          %s236 = smul.addr %s232, 64
          %s237 = scalar_lea.hbm %s0, %s236
          %s239 = sshll.u32 %s231, 4
          %s240 = int_to_ptr.vmem [resolvable:$true] %s239
          %242 = dma.hbm_to_vmem [thread:$0]  %s237, 256, %s240, %s228
        $region32: #{tpu_custom_call.1} parent=27 // pred_fallthru
          _
        // Predicated region
        $region33: #{tpu_custom_call.1} parent=27 // pred_check
          %p243 = pneg %p76
        $region34: #{tpu_custom_call.1} parent=27 // pred_check_branch
          %245 = sbr.rel (%p243) target = $region36
        $region35: #{tpu_custom_call.1} parent=27 // pred_region
          %s246 = sand.u32 %s18, 1
          %s247 = scalar_lea.sflag [#allocation7], %s246
          %s248 = sand.u32 %s66, 1
          %s249 = smul.addr %s248, 256
          %s250 = scalar_lea.vmem [#allocation6], %s249
          %s251 = smul.u32 64, %s26
          %s253 = ssub.s32 4096, 4096
          %254 = vsyncadd %s247, %s253
          %s255 = smul.addr %s251, 64
          %s256 = scalar_lea.hbm %s1, %s255
          %s257 = sshll.u32 %s250, 4
          %s258 = int_to_ptr.vmem [resolvable:$true] %s257
          %263 = dma.hbm_to_vmem [thread:$0]  %s256, 4096, %s258, %s247, 64, 64, 4
        $region36: #{tpu_custom_call.1} parent=27 // pred_fallthru
          _
      $region28: #{tpu_custom_call.1} parent=5 // pred_fallthru
        _
      %p264 = scmp.le.s32.totalorder 1, %s18
      %p265 = scmp.lt.s32.totalorder %s18, 3
      %p266 = pnand %p264, %p265
      %p267 = pneg %p266
      // Predicated region
      $region37: #{tpu_custom_call.1} parent=5 // pred_check
        _
      $region38: #{tpu_custom_call.1} parent=5 // pred_check_branch
        %269 = sbr.rel (%p266) target = $region40
      $region39: #{tpu_custom_call.1} parent=5 // pred_region
        %s270 = ssub.s32 %s18, 1
        %s271 = sand.u32 %s43, 1
        %s272 = scalar_lea.sflag [#allocation4], %s271
        %s273 = sand.u32 %s43, 1
        %s274 = smul.addr %s273, 16
        %s275 = scalar_lea.vmem [#allocation3], %s274
        // Predicated region
        $region41: #{tpu_custom_call.1} parent=39 // pred_check
          %p276 = pneg %p56
        $region42: #{tpu_custom_call.1} parent=39 // pred_check_branch
          %278 = sbr.rel (%p276) target = $region44
        $region43: #{tpu_custom_call.1} parent=39 // pred_region
          %279 = dma.done %s272, 256
        $region44: #{tpu_custom_call.1} parent=39 // pred_fallthru
          _
        %s280 = sand.u32 %s23, 1
        %s281 = scalar_lea.sflag [#allocation7], %s280
        %s282 = sand.u32 %s69, 1
        %s283 = smul.addr %s282, 256
        %s284 = scalar_lea.vmem [#allocation6], %s283
        // Predicated region
        $region45: #{tpu_custom_call.1} parent=39 // pred_check
          %p285 = pneg %p82
        $region46: #{tpu_custom_call.1} parent=39 // pred_check_branch
          %287 = sbr.rel (%p285) target = $region48
        $region47: #{tpu_custom_call.1} parent=39 // pred_region
          %288 = dma.done %s281, 4096
        $region48: #{tpu_custom_call.1} parent=39 // pred_fallthru
          _
        // Predicated region
        $region49: #{tpu_custom_call.1} parent=39 // pred_check
          %p289 = pneg %p129
        $region50: #{tpu_custom_call.1} parent=39 // pred_check_branch
          %291 = sbr.rel (%p289) target = $region52
        $region51: #{tpu_custom_call.1} parent=39 // pred_region
          %292 = dma.done [#allocation7], 1024
        $region52: #{tpu_custom_call.1} parent=39 // pred_fallthru
          _
        %s293 = sand.u32 %s43, 1
        %s294 = scalar_lea.sflag [#allocation4], %s293
        %s295 = sand.u32 %s43, 1
        %s296 = smul.addr %s295, 16
        %s297 = scalar_lea.vmem [#allocation3], %s296
        %p298 = pneg %p56
        %p299 = pneg %p53
        %s300 = sand.u32 %s23, 1
        %s301 = scalar_lea.sflag [#allocation7], %s300
        %s302 = sand.u32 %s69, 1
        %s303 = smul.addr %s302, 256
        %s304 = scalar_lea.vmem [#allocation6], %s303
        %p305 = pneg %p82
        %p306 = pneg %p79
        %p307 = pneg %p103
        %p308 = pneg %p100
        %p309 = pneg %p129
        %p310 = pneg %p126
        %p311 = scmp.lt.s32.totalorder %s27, 0
        %s312 = scalar_select %p311, %s27, 0
        %s313 = scalar_lea.vmem %s4, %s312
        %p314 = pneg %p155
        %p315 = pneg %p152
        %p316 = pneg %p181
        %p317 = pneg %p178
        %s318 = smul.u32 4, %s28
        %s319 = smul.u32 64, %s28
        %p320 = scmp.lt.s32.totalorder %s27, 0
        %s321 = scalar_select %p320, %s27, 0
        %s322 = scalar_lea.vmem %s4, %s321
        %p324 = scmp.eq.s32.totalorder %s28, 0
        // Predicated region
        $region53: #{tpu_custom_call.1} parent=39 // pred_check
          %p325 = pneg %p324
        $region54: #{tpu_custom_call.1} parent=39 // pred_check_branch
          %327 = sbr.rel (%p325) target = $region56
        $region55: #{tpu_custom_call.1} parent=39 // pred_region
          %328 = vst [vmem:[#allocation2] sm:$0xff] 0.0
        $region56: #{tpu_custom_call.1} parent=39 // pred_fallthru
          _
        %v329 = vld [vmem:[#allocation2] sm:$0xff]
        %v330 = vld [vmem:[%s275] sm:$0xff]
        %v331 = vld [vmem:[%s275 + $0x8] sm:$0xff]
        %v332 = vld [vmem:[%s284] sm:$0xf]
        %v333 = vld [vmem:[%s284 + $0x4] sm:$0xf]
        %v334 = vld [vmem:[%s284 + $0x8] sm:$0xf]
        %v335 = vld [vmem:[%s284 + $0xc] sm:$0xf]
        %v336 = vld [vmem:[%s284 + $0x10] sm:$0xf]
        %v337 = vld [vmem:[%s284 + $0x14] sm:$0xf]
        %v338 = vld [vmem:[%s284 + $0x18] sm:$0xf]
        %v339 = vld [vmem:[%s284 + $0x1c] sm:$0xf]
        %v340 = vld [vmem:[%s284 + $0x20] sm:$0xf]
        %v341 = vld [vmem:[%s284 + $0x24] sm:$0xf]
        %v342 = vld [vmem:[%s284 + $0x28] sm:$0xf]
        %v343 = vld [vmem:[%s284 + $0x2c] sm:$0xf]
        %v344 = vld [vmem:[%s284 + $0x30] sm:$0xf]
        %v345 = vld [vmem:[%s284 + $0x34] sm:$0xf]
        %v346 = vld [vmem:[%s284 + $0x38] sm:$0xf]
        %v347 = vld [vmem:[%s284 + $0x3c] sm:$0xf]
        %v348 = vld [vmem:[%s284 + $0x40] sm:$0xf]
        %v349 = vld [vmem:[%s284 + $0x44] sm:$0xf]
        %v350 = vld [vmem:[%s284 + $0x48] sm:$0xf]
        %v351 = vld [vmem:[%s284 + $0x4c] sm:$0xf]
        %v352 = vld [vmem:[%s284 + $0x50] sm:$0xf]
        %v353 = vld [vmem:[%s284 + $0x54] sm:$0xf]
        %v354 = vld [vmem:[%s284 + $0x58] sm:$0xf]
        %v355 = vld [vmem:[%s284 + $0x5c] sm:$0xf]
        %v356 = vld [vmem:[%s284 + $0x60] sm:$0xf]
        %v357 = vld [vmem:[%s284 + $0x64] sm:$0xf]
        %v358 = vld [vmem:[%s284 + $0x68] sm:$0xf]
        %v359 = vld [vmem:[%s284 + $0x6c] sm:$0xf]
        %v360 = vld [vmem:[%s284 + $0x70] sm:$0xf]
        %v361 = vld [vmem:[%s284 + $0x74] sm:$0xf]
        %v362 = vld [vmem:[%s284 + $0x78] sm:$0xf]
        %v363 = vld [vmem:[%s284 + $0x7c] sm:$0xf]
        %v364 = vld [vmem:[%s284 + $0x80] sm:$0xf]
        %v365 = vld [vmem:[%s284 + $0x84] sm:$0xf]
        %v366 = vld [vmem:[%s284 + $0x88] sm:$0xf]
        %v367 = vld [vmem:[%s284 + $0x8c] sm:$0xf]
        %v368 = vld [vmem:[%s284 + $0x90] sm:$0xf]
        %v369 = vld [vmem:[%s284 + $0x94] sm:$0xf]
        %v370 = vld [vmem:[%s284 + $0x98] sm:$0xf]
        %v371 = vld [vmem:[%s284 + $0x9c] sm:$0xf]
        %v372 = vld [vmem:[%s284 + $0xa0] sm:$0xf]
        %v373 = vld [vmem:[%s284 + $0xa4] sm:$0xf]
        %v374 = vld [vmem:[%s284 + $0xa8] sm:$0xf]
        %v375 = vld [vmem:[%s284 + $0xac] sm:$0xf]
        %v376 = vld [vmem:[%s284 + $0xb0] sm:$0xf]
        %v377 = vld [vmem:[%s284 + $0xb4] sm:$0xf]
        %v378 = vld [vmem:[%s284 + $0xb8] sm:$0xf]
        %v379 = vld [vmem:[%s284 + $0xbc] sm:$0xf]
        %v380 = vld [vmem:[%s284 + $0xc0] sm:$0xf]
        %v381 = vld [vmem:[%s284 + $0xc4] sm:$0xf]
        %v382 = vld [vmem:[%s284 + $0xc8] sm:$0xf]
        %v383 = vld [vmem:[%s284 + $0xcc] sm:$0xf]
        %v384 = vld [vmem:[%s284 + $0xd0] sm:$0xf]
        %v385 = vld [vmem:[%s284 + $0xd4] sm:$0xf]
        %v386 = vld [vmem:[%s284 + $0xd8] sm:$0xf]
        %v387 = vld [vmem:[%s284 + $0xdc] sm:$0xf]
        %v388 = vld [vmem:[%s284 + $0xe0] sm:$0xf]
        %v389 = vld [vmem:[%s284 + $0xe4] sm:$0xf]
        %v390 = vld [vmem:[%s284 + $0xe8] sm:$0xf]
        %v391 = vld [vmem:[%s284 + $0xec] sm:$0xf]
        %v392 = vld [vmem:[%s284 + $0xf0] sm:$0xf]
        %v393 = vld [vmem:[%s284 + $0xf4] sm:$0xf]
        %v394 = vld [vmem:[%s284 + $0xf8] sm:$0xf]
        %v395 = vld [vmem:[%s284 + $0xfc] sm:$0xf]
        %v398 = vunpack.c.l.b16 %v330
        %v399 = vunpack.c.h.b16 %v330
        %v400 = vunpack.c.l.b16 %v331
        %v401 = vunpack.c.h.b16 %v331
        %v402 = vpack.c.b16 %v398, %v398
        %v403 = vpack.c.b16 %v399, %v399
        %v404 = vpack.c.b16 %v400, %v400
        %v405 = vpack.c.b16 %v401, %v401
        %v474 = vunpack.c.l.b16 %v332
        %v475 = vunpack.c.l.b16 %v333
        %v476 = vunpack.c.l.b16 %v334
        %v477 = vunpack.c.l.b16 %v335
        %v478 = vunpack.c.l.b16 %v336
        %v479 = vunpack.c.l.b16 %v337
        %v480 = vunpack.c.l.b16 %v338
        %v481 = vunpack.c.l.b16 %v339
        %v482 = vunpack.c.l.b16 %v340
        %v483 = vunpack.c.l.b16 %v341
        %v484 = vunpack.c.l.b16 %v342
        %v485 = vunpack.c.l.b16 %v343
        %v486 = vunpack.c.l.b16 %v344
        %v487 = vunpack.c.l.b16 %v345
        %v488 = vunpack.c.l.b16 %v346
        %v489 = vunpack.c.l.b16 %v347
        %v490 = vunpack.c.l.b16 %v348
        %v491 = vunpack.c.l.b16 %v349
        %v492 = vunpack.c.l.b16 %v350
        %v493 = vunpack.c.l.b16 %v351
        %v494 = vunpack.c.l.b16 %v352
        %v495 = vunpack.c.l.b16 %v353
        %v496 = vunpack.c.l.b16 %v354
        %v497 = vunpack.c.l.b16 %v355
        %v498 = vunpack.c.l.b16 %v356
        %v499 = vunpack.c.l.b16 %v357
        %v500 = vunpack.c.l.b16 %v358
        %v501 = vunpack.c.l.b16 %v359
        %v502 = vunpack.c.l.b16 %v360
        %v503 = vunpack.c.l.b16 %v361
        %v504 = vunpack.c.l.b16 %v362
        %v505 = vunpack.c.l.b16 %v363
        %v506 = vunpack.c.l.b16 %v364
        %v507 = vunpack.c.l.b16 %v365
        %v508 = vunpack.c.l.b16 %v366
        %v509 = vunpack.c.l.b16 %v367
        %v510 = vunpack.c.l.b16 %v368
        %v511 = vunpack.c.l.b16 %v369
        %v512 = vunpack.c.l.b16 %v370
        %v513 = vunpack.c.l.b16 %v371
        %v514 = vunpack.c.l.b16 %v372
        %v515 = vunpack.c.l.b16 %v373
        %v516 = vunpack.c.l.b16 %v374
        %v517 = vunpack.c.l.b16 %v375
        %v518 = vunpack.c.l.b16 %v376
        %v519 = vunpack.c.l.b16 %v377
        %v520 = vunpack.c.l.b16 %v378
        %v521 = vunpack.c.l.b16 %v379
        %v522 = vunpack.c.l.b16 %v380
        %v523 = vunpack.c.l.b16 %v381
        %v524 = vunpack.c.l.b16 %v382
        %v525 = vunpack.c.l.b16 %v383
        %v526 = vunpack.c.l.b16 %v384
        %v527 = vunpack.c.l.b16 %v385
        %v528 = vunpack.c.l.b16 %v386
        %v529 = vunpack.c.l.b16 %v387
        %v530 = vunpack.c.l.b16 %v388
        %v531 = vunpack.c.l.b16 %v389
        %v532 = vunpack.c.l.b16 %v390
        %v533 = vunpack.c.l.b16 %v391
        %v534 = vunpack.c.l.b16 %v392
        %v535 = vunpack.c.l.b16 %v393
        %v536 = vunpack.c.l.b16 %v394
        %v537 = vunpack.c.l.b16 %v395
        %v538 = vpack.c.b16 %v475, %v474
        %v539 = vpack.c.b16 %v477, %v476
        %v540 = vpack.c.b16 %v479, %v478
        %v541 = vpack.c.b16 %v481, %v480
        %v542 = vpack.c.b16 %v483, %v482
        %v543 = vpack.c.b16 %v485, %v484
        %v544 = vpack.c.b16 %v487, %v486
        %v545 = vpack.c.b16 %v489, %v488
        %v546 = vpack.c.b16 %v491, %v490
        %v547 = vpack.c.b16 %v493, %v492
        %v548 = vpack.c.b16 %v495, %v494
        %v549 = vpack.c.b16 %v497, %v496
        %v550 = vpack.c.b16 %v499, %v498
        %v551 = vpack.c.b16 %v501, %v500
        %v552 = vpack.c.b16 %v503, %v502
        %v553 = vpack.c.b16 %v505, %v504
        %v554 = vpack.c.b16 %v507, %v506
        %v555 = vpack.c.b16 %v509, %v508
        %v556 = vpack.c.b16 %v511, %v510
        %v557 = vpack.c.b16 %v513, %v512
        %v558 = vpack.c.b16 %v515, %v514
        %v559 = vpack.c.b16 %v517, %v516
        %v560 = vpack.c.b16 %v519, %v518
        %v561 = vpack.c.b16 %v521, %v520
        %v562 = vpack.c.b16 %v523, %v522
        %v563 = vpack.c.b16 %v525, %v524
        %v564 = vpack.c.b16 %v527, %v526
        %v565 = vpack.c.b16 %v529, %v528
        %v566 = vpack.c.b16 %v531, %v530
        %v567 = vpack.c.b16 %v533, %v532
        %v568 = vpack.c.b16 %v535, %v534
        %v569 = vpack.c.b16 %v537, %v536
        %602 = vmatprep.subr.bf16.mxu0 0
        %603 = vmatpush1.bf16.msra.mxu0 %v538
        %604 = vmatprep.subr.bf16.mxu0 0
        %605 = vmatpush1.bf16.msra.mxu0 %v539
        %606 = vmatprep.subr.bf16.mxu0 0
        %607 = vmatpush1.bf16.msra.mxu0 %v540
        %608 = vmatprep.subr.bf16.mxu0 0
        %609 = vmatpush1.bf16.msra.mxu0 %v541
        %610 = vmatprep.subr.bf16.mxu0 0
        %611 = vmatpush1.bf16.msra.mxu0 %v542
        %612 = vmatprep.subr.bf16.mxu0 0
        %613 = vmatpush1.bf16.msra.mxu0 %v543
        %614 = vmatprep.subr.bf16.mxu0 0
        %615 = vmatpush1.bf16.msra.mxu0 %v544
        %616 = vmatprep.subr.bf16.mxu0 0
        %617 = vmatpush1.bf16.msra.mxu0 %v545
        %618 = vmatprep.subr.bf16.mxu0 0
        %619 = vmatpush1.bf16.msra.mxu0 %v546
        %620 = vmatprep.subr.bf16.mxu0 0
        %621 = vmatpush1.bf16.msra.mxu0 %v547
        %622 = vmatprep.subr.bf16.mxu0 0
        %623 = vmatpush1.bf16.msra.mxu0 %v548
        %624 = vmatprep.subr.bf16.mxu0 0
        %625 = vmatpush1.bf16.msra.mxu0 %v549
        %626 = vmatprep.subr.bf16.mxu0 0
        %627 = vmatpush1.bf16.msra.mxu0 %v550
        %628 = vmatprep.subr.bf16.mxu0 0
        %629 = vmatpush1.bf16.msra.mxu0 %v551
        %630 = vmatprep.subr.bf16.mxu0 0
        %631 = vmatpush1.bf16.msra.mxu0 %v552
        %632 = vmatprep.subr.bf16.mxu0 0
        %633 = vmatpush1.bf16.msra.mxu0 %v553
        %634 = vmatprep.mubr.bf16.mxu0 %v403
        %635 = vmatmul.mubr.bf16.gmra.mrb[0].mxu0 %v402
        %v636 = vpop.f32.mrb[0].mxu0
        %v637 = vadd.f32 0.0, %v636
        %v638 = vpop.f32.mrb[0].mxu0
        %v639 = vpop.f32.mrb[0].mxu0
        %v640 = vpop.f32.mrb[0].mxu0
        %641 = vdwg.mxu0
        %642 = vmatprep.subr.bf16.mxu0 0
        %643 = vmatpush1.bf16.msra.mxu0 %v554
        %644 = vmatprep.subr.bf16.mxu0 0
        %645 = vmatpush1.bf16.msra.mxu0 %v555
        %646 = vmatprep.subr.bf16.mxu0 0
        %647 = vmatpush1.bf16.msra.mxu0 %v556
        %648 = vmatprep.subr.bf16.mxu0 0
        %649 = vmatpush1.bf16.msra.mxu0 %v557
        %650 = vmatprep.subr.bf16.mxu0 0
        %651 = vmatpush1.bf16.msra.mxu0 %v558
        %652 = vmatprep.subr.bf16.mxu0 0
        %653 = vmatpush1.bf16.msra.mxu0 %v559
        %654 = vmatprep.subr.bf16.mxu0 0
        %655 = vmatpush1.bf16.msra.mxu0 %v560
        %656 = vmatprep.subr.bf16.mxu0 0
        %657 = vmatpush1.bf16.msra.mxu0 %v561
        %658 = vmatprep.subr.bf16.mxu0 0
        %659 = vmatpush1.bf16.msra.mxu0 %v562
        %660 = vmatprep.subr.bf16.mxu0 0
        %661 = vmatpush1.bf16.msra.mxu0 %v563
        %662 = vmatprep.subr.bf16.mxu0 0
        %663 = vmatpush1.bf16.msra.mxu0 %v564
        %664 = vmatprep.subr.bf16.mxu0 0
        %665 = vmatpush1.bf16.msra.mxu0 %v565
        %666 = vmatprep.subr.bf16.mxu0 0
        %667 = vmatpush1.bf16.msra.mxu0 %v566
        %668 = vmatprep.subr.bf16.mxu0 0
        %669 = vmatpush1.bf16.msra.mxu0 %v567
        %670 = vmatprep.subr.bf16.mxu0 0
        %671 = vmatpush1.bf16.msra.mxu0 %v568
        %672 = vmatprep.subr.bf16.mxu0 0
        %673 = vmatpush1.bf16.msra.mxu0 %v569
        %674 = vmatprep.mubr.bf16.mxu0 %v405
        %675 = vmatmul.mubr.bf16.gmra.mrb[0].mxu0 %v404
        %v676 = vpop.f32.mrb[0].mxu0
        %v677 = vadd.f32 %v637, %v676
        %v678 = vpop.f32.mrb[0].mxu0
        %v679 = vpop.f32.mrb[0].mxu0
        %v680 = vpop.f32.mrb[0].mxu0
        %681 = vdwg.mxu0
        %v682 = vadd.f32 %v329, %v677
        %683 = vst [vmem:[#allocation2] sm:$0xff] %v682
        %p684 = scmp.eq.s32.totalorder %s28, 1
        // Predicated region
        $region57: #{tpu_custom_call.1} parent=39 // pred_check
          %p685 = pneg %p684
        $region58: #{tpu_custom_call.1} parent=39 // pred_check_branch
          %687 = sbr.rel (%p685) target = $region60
        $region59: #{tpu_custom_call.1} parent=39 // pred_region
          %v688 = vld [vmem:[#allocation2] sm:$0xff]
          %v689 = vld [vmem:[%s2] sm:$0x1]
          %v691 = vlaneseq
          %v692 = vshrl.u32 %v691, 7
          %v693 = vsub.s32 0, %v692
          %v694 = vrot.slane %v689, %v693
          %v696 = vadd.f32 %v688, %v694
          %v697 = vpack.c.bf16 %v696, %v696
          %v698 = vld [vmem:[#allocation8] sm:$0xf]
          %v699 = vld [vmem:[#allocation8 + $0x4] sm:$0xf]
          %v700 = vld [vmem:[#allocation8 + $0x8] sm:$0xf]
          %v701 = vld [vmem:[#allocation8 + $0xc] sm:$0xf]
          %v702 = vld [vmem:[#allocation8 + $0x10] sm:$0xf]
          %v703 = vld [vmem:[#allocation8 + $0x14] sm:$0xf]
          %v704 = vld [vmem:[#allocation8 + $0x18] sm:$0xf]
          %v705 = vld [vmem:[#allocation8 + $0x1c] sm:$0xf]
          %v706 = vld [vmem:[#allocation8 + $0x20] sm:$0xf]
          %v707 = vld [vmem:[#allocation8 + $0x24] sm:$0xf]
          %v708 = vld [vmem:[#allocation8 + $0x28] sm:$0xf]
          %v709 = vld [vmem:[#allocation8 + $0x2c] sm:$0xf]
          %v710 = vld [vmem:[#allocation8 + $0x30] sm:$0xf]
          %v711 = vld [vmem:[#allocation8 + $0x34] sm:$0xf]
          %v712 = vld [vmem:[#allocation8 + $0x38] sm:$0xf]
          %v713 = vld [vmem:[#allocation8 + $0x3c] sm:$0xf]
          %v714 = vld [vmem:[%s322] sm:$0x1]
          %v716 = vlaneseq
          %v717 = vshrl.u32 %v716, 7
          %v718 = vsub.s32 0, %v717
          %v719 = vrot.slane %v714, %v718
          %v737 = vunpack.c.l.b16 %v698
          %v738 = vunpack.c.l.b16 %v699
          %v739 = vunpack.c.l.b16 %v700
          %v740 = vunpack.c.l.b16 %v701
          %v741 = vunpack.c.l.b16 %v702
          %v742 = vunpack.c.l.b16 %v703
          %v743 = vunpack.c.l.b16 %v704
          %v744 = vunpack.c.l.b16 %v705
          %v745 = vunpack.c.l.b16 %v706
          %v746 = vunpack.c.l.b16 %v707
          %v747 = vunpack.c.l.b16 %v708
          %v748 = vunpack.c.l.b16 %v709
          %v749 = vunpack.c.l.b16 %v710
          %v750 = vunpack.c.l.b16 %v711
          %v751 = vunpack.c.l.b16 %v712
          %v752 = vunpack.c.l.b16 %v713
          %v753 = vpack.c.b16 %v738, %v737
          %v754 = vpack.c.b16 %v740, %v739
          %v755 = vpack.c.b16 %v742, %v741
          %v756 = vpack.c.b16 %v744, %v743
          %v757 = vpack.c.b16 %v746, %v745
          %v758 = vpack.c.b16 %v748, %v747
          %v759 = vpack.c.b16 %v750, %v749
          %v760 = vpack.c.b16 %v752, %v751
          %769 = vmatprep.subr.bf16.mxu0 0
          %770 = vmatpush1.bf16.msra.mxu0 %v753
          %771 = vmatprep.subr.bf16.mxu0 0
          %772 = vmatpush1.bf16.msra.mxu0 %v754
          %773 = vmatprep.subr.bf16.mxu0 0
          %774 = vmatpush1.bf16.msra.mxu0 %v755
          %775 = vmatprep.subr.bf16.mxu0 0
          %776 = vmatpush1.bf16.msra.mxu0 %v756
          %777 = vmatprep.subr.bf16.mxu0 0
          %778 = vmatpush1.bf16.msra.mxu0 %v757
          %779 = vmatprep.subr.bf16.mxu0 0
          %780 = vmatpush1.bf16.msra.mxu0 %v758
          %781 = vmatprep.subr.bf16.mxu0 0
          %782 = vmatpush1.bf16.msra.mxu0 %v759
          %783 = vmatprep.subr.bf16.mxu0 0
          %784 = vmatpush1.bf16.msra.mxu0 %v760
          %785 = vmatprep.subr.bf16.mxu0 0
          %786 = vmatpush1.bf16.msra.mxu0 0
          %787 = vmatprep.subr.bf16.mxu0 0
          %788 = vmatpush1.bf16.msra.mxu0 0
          %789 = vmatprep.subr.bf16.mxu0 0
          %790 = vmatpush1.bf16.msra.mxu0 0
          %791 = vmatprep.subr.bf16.mxu0 0
          %792 = vmatpush1.bf16.msra.mxu0 0
          %793 = vmatprep.subr.bf16.mxu0 0
          %794 = vmatpush1.bf16.msra.mxu0 0
          %795 = vmatprep.subr.bf16.mxu0 0
          %796 = vmatpush1.bf16.msra.mxu0 0
          %797 = vmatprep.subr.bf16.mxu0 0
          %798 = vmatpush1.bf16.msra.mxu0 0
          %799 = vmatprep.subr.bf16.mxu0 0
          %800 = vmatpush1.bf16.msra.mxu0 0
          %801 = vmatprep.mubr.bf16.mxu0 0
          %802 = vmatmul.mubr.bf16.gmra.mrb[0].mxu0 %v697
          %v803 = vpop.f32.mrb[0].mxu0
          %v804 = vadd.f32 %v719, %v803
          %v805 = vpop.f32.mrb[0].mxu0
          %v806 = vpop.f32.mrb[0].mxu0
          %v807 = vpop.f32.mrb[0].mxu0
          %808 = vdwg.mxu0
          %809 = vst [vmem:[#allocation9] sm:$0xff] %v804
        $region60: #{tpu_custom_call.1} parent=39 // pred_fallthru
          _
        // Predicated region
        $region61: #{tpu_custom_call.1} parent=39 // pred_check
          %p810 = pneg %p178
        $region62: #{tpu_custom_call.1} parent=39 // pred_check_branch
          %812 = sbr.rel (%p810) target = $region64
        $region63: #{tpu_custom_call.1} parent=39 // pred_region
          %s814 = ssub.s32 128, 128
          %815 = vsyncadd [#allocation5], %s814
          %s816 = smul.addr %s27, 128
          %s817 = scalar_lea.hbm %s5, %s816
          %s819 = sshll.u32 [#allocation9], 4
          %s820 = int_to_ptr.vmem [resolvable:$true] %s819
          %822 = dma.vmem_to_hbm [thread:$0]  %s820, 128, %s817, [#allocation5]
        $region64: #{tpu_custom_call.1} parent=39 // pred_fallthru
          _
        // Predicated region
        $region65: #{tpu_custom_call.1} parent=39 // pred_check
          %p823 = pneg %p178
        $region66: #{tpu_custom_call.1} parent=39 // pred_check_branch
          %825 = sbr.rel (%p823) target = $region68
        $region67: #{tpu_custom_call.1} parent=39 // pred_region
          %826 = dma.done [#allocation5], 128
        $region68: #{tpu_custom_call.1} parent=39 // pred_fallthru
          _
      $region40: #{tpu_custom_call.1} parent=5 // pred_fallthru
        _
      %p827 = scmp.le.s32.totalorder 2, %s18
      // Predicated region
      $region69: #{tpu_custom_call.1} parent=5 // pred_check
        %p828 = pneg %p827
      $region70: #{tpu_custom_call.1} parent=5 // pred_check_branch
        %830 = sbr.rel (%p828) target = $region72
      $region71: #{tpu_custom_call.1} parent=5 // pred_region
        %s831 = ssub.s32 %s18, 2
      $region72: #{tpu_custom_call.1} parent=5 // pred_fallthru
        _
    $region6: #{tpu_custom_call.1} parent=1 // loop_footer
      %s22 = sadd.s32 1, %s18
    $region7: #{tpu_custom_call.1} parent=1 // loop_footer_branch
      %17 = sbr.rel target = $region3
    $region8: #{tpu_custom_call.1} parent=1 // loop_exit
      _
    %832 = vsyncpa [#allocation4], 1
    %s833 = scalar_lea.sflag [#allocation4], 1
    %834 = vsyncpa %s833, 1
    %835 = vsyncpa [#allocation7], 1
    %s836 = scalar_lea.sflag [#allocation7], 1
    %837 = vsyncpa %s836, 1
    %838 = vsyncpa [#allocation5], 1
    %s839 = scalar_lea.sflag [#allocation5], 1
    %840 = vsyncpa %s839, 1

</llo_original>
